<compile_context>
chip_gen: v5e
topology: v5e:2x2
jax: 0.10.0
libtpu: 0.0.40
codegen_flags: <defaults>
</compile_context>

<pallas_src>
import functools

import jax
import jax.numpy as jnp
from jax import lax
from jax.experimental import pallas as pl
from jax.experimental.pallas import tpu as pltpu

_EPS = 1e-6


def _round_up(x, m):
    return ((x + m - 1) // m) * m


def _vmem_capacity_bytes():
    try:
        info = pltpu.get_tpu_info()
        cap = getattr(info, "vmem_capacity_bytes", None)
        if cap:
            return int(cap)
    except Exception:
        pass
    return 64 * 1024 * 1024  # conservative (v7x per-TC)


# ---------------------------------------------------------------------------
# Resident single-pass kernel: whole row dimension in VMEM (one feature tile).
# ---------------------------------------------------------------------------
def _resident_kernel(x_ref, a_ref, b_ref, o_ref, *, inv_m):
    x = x_ref[...].astype(jnp.float32)
    s = jnp.sum(x, axis=0, keepdims=True)                  # (1, dc)
    ssq = jnp.sum(x * x, axis=0, keepdims=True)            # (1, dc)
    mean = s * inv_m
    var = jnp.maximum(ssq * inv_m - mean * mean, 0.0)
    inv_std = lax.rsqrt(var + _EPS)
    scale = a_ref[...] * inv_std                            # (1, dc)
    shift = b_ref[...] - mean * scale                       # (1, dc)
    o_ref[...] = (x * scale + shift).astype(o_ref.dtype)


# ---------------------------------------------------------------------------
# Streaming pass 1: per-feature sum / sum-of-squares over row tiles,
# finalized into fused (scale, shift).  Last (partial) row tile is masked.
# ---------------------------------------------------------------------------
def _stats_kernel(x_ref, a_ref, b_ref, scale_ref, shift_ref,
                  sum_ref, sumsq_ref, *, inv_m, m_total, mt, mask_rows):
    i = pl.program_id(1)  # row-tile index (reduction axis, last in grid)

    @pl.when(i == 0)
    def _():
        sum_ref[...] = jnp.zeros_like(sum_ref)
        sumsq_ref[...] = jnp.zeros_like(sumsq_ref)

    x = x_ref[...].astype(jnp.float32)
    if mask_rows:
        row = lax.broadcasted_iota(jnp.int32, x.shape, 0) + i * mt
        x = jnp.where(row < m_total, x, 0.0)
    sum_ref[...] += jnp.sum(x, axis=0, keepdims=True)
    sumsq_ref[...] += jnp.sum(x * x, axis=0, keepdims=True)

    @pl.when(i == pl.num_programs(1) - 1)
    def _():
        mean = sum_ref[...] * inv_m
        var = jnp.maximum(sumsq_ref[...] * inv_m - mean * mean, 0.0)
        inv_std = lax.rsqrt(var + _EPS)
        scale = a_ref[...] * inv_std
        scale_ref[...] = scale
        shift_ref[...] = b_ref[...] - mean * scale


# ---------------------------------------------------------------------------
# Streaming pass 2: fully parallel normalize, out = x * scale + shift.
# (Out-of-bounds rows of the last tile are computed but never written back.)
# ---------------------------------------------------------------------------
def _norm_kernel(x_ref, scale_ref, shift_ref, o_ref):
    x = x_ref[...].astype(jnp.float32)
    o_ref[...] = (x * scale_ref[...] + shift_ref[...]).astype(o_ref.dtype)


def layer_norm(x, a, b, *, row_tile=None, feat_tile=None, force_two_pass=False):
    """x: (B, N, d); a, b: (1, 1, d). Returns (B, N, d)."""
    B, N, d = x.shape
    M = B * N
    itemsize = jnp.dtype(x.dtype).itemsize
    sub = max(8, 32 // itemsize)  # sublane packing: 8 f32, 16 bf16, 32 int8/fp8

    x2 = x.reshape(M, d)
    a2 = a.reshape(1, d).astype(jnp.float32)
    b2 = b.reshape(1, d).astype(jnp.float32)
    inv_m = 1.0 / M

    vmem_cap = _vmem_capacity_bytes()
    vmem_limit = int(vmem_cap * 0.75)

    # --- Resident-path feature tile ------------------------------------------
    # Split features into >=2 tiles when possible so the next tile's DMA
    # overlaps compute and v7x's second TensorCore has a parallel axis > 1.
    if d % 128 == 0 and d >= 256:
        dc_res = d // 2 if (d // 2) % 128 == 0 else 128
    else:
        dc_res = d
    n_feat_res = d // dc_res
    buf_mult = 2 if n_feat_res > 1 else 1          # BlockSpec double-buffering
    resident_bytes = M * dc_res * (2 * itemsize * buf_mult + 4)
    use_resident = (not force_two_pass) and resident_bytes <= int(vmem_cap * 0.55)

    if use_resident:
        kern = functools.partial(_resident_kernel, inv_m=inv_m)
        out = pl.pallas_call(
            kern,
            out_shape=jax.ShapeDtypeStruct((M, d), x.dtype),
            grid_spec=pltpu.PrefetchScalarGridSpec(
                num_scalar_prefetch=0,
                grid=(n_feat_res,),
                in_specs=[
                    pl.BlockSpec((M, dc_res), lambda j: (0, j)),
                    pl.BlockSpec((1, dc_res), lambda j: (0, j)),
                    pl.BlockSpec((1, dc_res), lambda j: (0, j)),
                ],
                out_specs=pl.BlockSpec((M, dc_res), lambda j: (0, j)),
            ),
            compiler_params=pltpu.CompilerParams(
                dimension_semantics=("parallel",),
                vmem_limit_bytes=vmem_limit),
            cost_estimate=pl.CostEstimate(
                flops=int(5 * M * d),
                transcendentals=int(d),
                bytes_accessed=int(2 * M * d * itemsize)),
        )(x2, a2, b2)
        return out.reshape(B, N, d)

    # --- Streaming two-pass path ---------------------------------------------
    # Feature tile: full-width (contiguous DMA) unless d is a very wide
    # 128-multiple, in which case tile to keep blocks within budget.
    BLOCK_BUDGET = 4 * 1024 * 1024  # per-block cap; safe with v7x's 64 MiB VMEM
    if feat_tile is not None:
        if feat_tile != d and (feat_tile % 128 != 0 or d % feat_tile != 0):
            raise ValueError("feat_tile must equal d or be a multiple of 128 "
                             "that divides d")
        dc = feat_tile
    elif d % 128 == 0 and d * itemsize * 256 > BLOCK_BUDGET:
        dc = 512
        while d % dc != 0:
            dc //= 2  # 256, 128 (terminates: d % 128 == 0)
    else:
        dc = d

    if row_tile is not None:
        if row_tile % sub != 0:
            raise ValueError(f"row_tile must be a multiple of {sub} for "
                             f"dtype {x.dtype}")
        Mt = row_tile
    else:
        Mt = max(sub, min(2048, (BLOCK_BUDGET // (dc * itemsize)) // sub * sub))
    Mt = min(Mt, _round_up(M, sub))

    n_feat = d // dc
    n_rows = (M + Mt - 1) // Mt
    mask_rows = (M % Mt) != 0

    # Pass 1: per-feature stats -> fused (scale, shift).
    stats_kern = functools.partial(_stats_kernel, inv_m=inv_m, m_total=M,
                                   mt=Mt, mask_rows=mask_rows)
    scale, shift = pl.pallas_call(
        stats_kern,
        out_shape=(jax.ShapeDtypeStruct((1, d), jnp.float32),
                   jax.ShapeDtypeStruct((1, d), jnp.float32)),
        grid_spec=pltpu.PrefetchScalarGridSpec(
            num_scalar_prefetch=0,
            grid=(n_feat, n_rows),          # reduction (rows) axis last
            in_specs=[
                pl.BlockSpec((Mt, dc), lambda j, i: (i, j)),
                pl.BlockSpec((1, dc), lambda j, i: (0, j)),
                pl.BlockSpec((1, dc), lambda j, i: (0, j)),
            ],
            out_specs=(pl.BlockSpec((1, dc), lambda j, i: (0, j)),
                       pl.BlockSpec((1, dc), lambda j, i: (0, j))),
            scratch_shapes=[pltpu.VMEM((1, dc), jnp.float32),
                            pltpu.VMEM((1, dc), jnp.float32)],
        ),
        compiler_params=pltpu.CompilerParams(
            dimension_semantics=("parallel", "arbitrary"),
            vmem_limit_bytes=vmem_limit),
        cost_estimate=pl.CostEstimate(
            flops=int(3 * M * d),
            transcendentals=int(d),
            bytes_accessed=int(M * d * itemsize)),
    )(x2, a2, b2)

    # Pass 2: normalize with fully parallel (Mt, dc) tiles.
    out = pl.pallas_call(
        _norm_kernel,
        out_shape=jax.ShapeDtypeStruct((M, d), x.dtype),
        grid_spec=pltpu.PrefetchScalarGridSpec(
            num_scalar_prefetch=0,
            grid=(n_rows, n_feat),
            in_specs=[
                pl.BlockSpec((Mt, dc), lambda i, j: (i, j)),
                pl.BlockSpec((1, dc), lambda i, j: (0, j)),
                pl.BlockSpec((1, dc), lambda i, j: (0, j)),
            ],
            out_specs=pl.BlockSpec((Mt, dc), lambda i, j: (i, j)),
        ),
        compiler_params=pltpu.CompilerParams(
            dimension_semantics=("parallel", "parallel"),
            vmem_limit_bytes=vmem_limit),
        cost_estimate=pl.CostEstimate(
            flops=int(2 * M * d),
            transcendentals=0,
            bytes_accessed=int(2 * M * d * itemsize)),
    )(x2, scale, shift)

    return out.reshape(B, N, d)


def layer_norm_ref(x, a, b):
    xf = x.astype(jnp.float32)
    mean = jnp.mean(xf, axis=(0, 1), keepdims=True)
    var = jnp.mean((xf - mean) ** 2, axis=(0, 1), keepdims=True)
    return (a * (xf - mean) / jnp.sqrt(var + _EPS) + b).astype(x.dtype)


if __name__ == "__main__":
    key = jax.random.PRNGKey(0)
    ks = jax.random.split(key, 8)

    # Case 1: module-default params, small d (resident single-pass path,
    # no padding: blocks span the full (M, d) = (16, 32) array).
    B, N, d = 2, 8, 32
    x = jax.random.normal(ks[0], (B, N, d), dtype=jnp.float32)
    a = jnp.ones((1, 1, d), dtype=jnp.float32)   # matches nn.Parameter(ones)
    b = jnp.zeros((1, 1, d), dtype=jnp.float32)  # matches nn.Parameter(zeros)
    out = jax.block_until_ready(layer_norm(x, a, b))
    ref = layer_norm_ref(x, a, b)
    assert out.shape == (B, N, d)
    assert jnp.allclose(out, ref, atol=1e-4, rtol=1e-4)

    # Case 2: resident path with multiple feature tiles (d = 256 -> 2 x 128).
    B1, N1, d1 = 2, 16, 256
    x1 = jax.random.normal(ks[1], (B1, N1, d1), dtype=jnp.float32)
    a1 = jax.random.normal(ks[2], (1, 1, d1), dtype=jnp.float32)
    b1 = jax.random.normal(ks[3], (1, 1, d1), dtype=jnp.float32)
    out1 = jax.block_until_ready(layer_norm(x1, a1, b1))
    ref1 = layer_norm_ref(x1, a1, b1)
    assert jnp.allclose(out1, ref1, atol=1e-4, rtol=1e-4)

    # Case 3: streaming two-pass path, unaligned rows (M = 106, masked
    # remainder tile), full-width non-128-multiple feature dim (d = 160).
    B2, N2, d2 = 2, 53, 160
    x2 = jax.random.normal(ks[4], (B2, N2, d2), dtype=jnp.float32)
    a2 = jax.random.normal(ks[5], (1, 1, d2), dtype=jnp.float32)
    b2 = jax.random.normal(ks[6], (1, 1, d2), dtype=jnp.float32)
    out2 = jax.block_until_ready(
        layer_norm(x2, a2, b2, row_tile=32, force_two_pass=True))
    ref2 = layer_norm_ref(x2, a2, b2)
    assert out2.shape == (B2, N2, d2)
    assert jnp.allclose(out2, ref2, atol=1e-4, rtol=1e-4)

    # Case 4: streaming path with multiple feature tiles and unaligned rows.
    B3, N3, d3 = 3, 37, 256
    x3 = jax.random.normal(ks[7], (B3, N3, d3), dtype=jnp.float32)
    a3 = jnp.ones((1, 1, d3), dtype=jnp.float32)
    b3 = jnp.zeros((1, 1, d3), dtype=jnp.float32)
    out3 = jax.block_until_ready(
        layer_norm(x3, a3, b3, row_tile=16, feat_tile=128, force_two_pass=True))
    ref3 = layer_norm_ref(x3, a3, b3)
    assert jnp.allclose(out3, ref3, atol=1e-4, rtol=1e-4)

    print("KERNEL_OK")
</pallas_src>

<mosaic_0001>
module attributes {stable_mosaic.version = 11 : i64} {
  func.func @_resident_kernel(%arg0: i32, %arg1: memref<16x32xf32, #tpu.memory_space<vmem>>, %arg2: memref<1x32xf32, #tpu.memory_space<vmem>>, %arg3: memref<1x32xf32, #tpu.memory_space<vmem>>, %arg4: memref<16x32xf32, #tpu.memory_space<vmem>>) attributes {dimension_semantics = [#tpu.dimension_semantics<parallel>], iteration_bounds = array<i64: 1>, scalar_prefetch = 0 : i64, scratch_operands = 0 : i64, tpu.core_type = #tpu.core_type<tc>, window_params = [{transform_indices = @transform_0, window_bounds = array<i64: 16, 32>}, {transform_indices = @transform_1, window_bounds = array<i64: 1, 32>}, {transform_indices = @transform_2, window_bounds = array<i64: 1, 32>}, {transform_indices = @transform_3, window_bounds = array<i64: 16, 32>}]} {
    %c0 = arith.constant 0 : index
    %c0_0 = arith.constant 0 : index
    %0 = vector.load %arg1[%c0, %c0_0] : memref<16x32xf32, #tpu.memory_space<vmem>>, vector<16x32xf32>
    %cst = arith.constant dense<0.000000e+00> : vector<32xf32>
    %1 = vector.multi_reduction <add>, %0, %cst [0] : vector<16x32xf32> to vector<32xf32>
    %2 = vector.shape_cast %1 : vector<32xf32> to vector<1x32xf32>
    %3 = arith.mulf %0, %0 : vector<16x32xf32>
    %cst_1 = arith.constant dense<0.000000e+00> : vector<32xf32>
    %4 = vector.multi_reduction <add>, %3, %cst_1 [0] : vector<16x32xf32> to vector<32xf32>
    %5 = vector.shape_cast %4 : vector<32xf32> to vector<1x32xf32>
    %cst_2 = arith.constant 6.250000e-02 : f32
    %6 = vector.broadcast %cst_2 : f32 to vector<1x32xf32>
    %7 = arith.mulf %2, %6 : vector<1x32xf32>
    %cst_3 = arith.constant 6.250000e-02 : f32
    %8 = vector.broadcast %cst_3 : f32 to vector<1x32xf32>
    %9 = arith.mulf %5, %8 : vector<1x32xf32>
    %10 = arith.mulf %7, %7 : vector<1x32xf32>
    %11 = arith.subf %9, %10 : vector<1x32xf32>
    %cst_4 = arith.constant 0.000000e+00 : f32
    %12 = vector.broadcast %cst_4 : f32 to vector<1x32xf32>
    %13 = arith.maximumf %11, %12 : vector<1x32xf32>
    %cst_5 = arith.constant 9.99999997E-7 : f32
    %14 = vector.broadcast %cst_5 : f32 to vector<1x32xf32>
    %15 = arith.addf %13, %14 : vector<1x32xf32>
    %16 = math.rsqrt %15 : vector<1x32xf32>
    %c0_6 = arith.constant 0 : index
    %c0_7 = arith.constant 0 : index
    %17 = vector.load %arg2[%c0_6, %c0_7] : memref<1x32xf32, #tpu.memory_space<vmem>>, vector<1x32xf32>
    %18 = arith.mulf %17, %16 : vector<1x32xf32>
    %c0_8 = arith.constant 0 : index
    %c0_9 = arith.constant 0 : index
    %19 = vector.load %arg3[%c0_8, %c0_9] : memref<1x32xf32, #tpu.memory_space<vmem>>, vector<1x32xf32>
    %20 = arith.mulf %7, %18 : vector<1x32xf32>
    %21 = arith.subf %19, %20 : vector<1x32xf32>
    %22 = vector.broadcast %18 : vector<1x32xf32> to vector<16x32xf32>
    %23 = arith.mulf %0, %22 : vector<16x32xf32>
    %24 = vector.broadcast %21 : vector<1x32xf32> to vector<16x32xf32>
    %25 = arith.addf %23, %24 : vector<16x32xf32>
    %c0_10 = arith.constant 0 : index
    %c0_11 = arith.constant 0 : index
    %26 = vector.load %arg4[%c0_10, %c0_11] : memref<16x32xf32, #tpu.memory_space<vmem>>, vector<16x32xf32>
    tpu.vector_store %arg4[%c0_10, %c0_11], %25 {strides = array<i32>} : memref<16x32xf32, #tpu.memory_space<vmem>>, vector<16x32xf32>,
    return
  }
  func.func @transform_0(%arg0: i32) -> (i32, i32) {
    %c0_i32 = arith.constant 0 : i32
    %c0_i32_0 = arith.constant 0 : i32
    return %c0_i32, %arg0 : i32, i32
  }
  func.func @transform_1(%arg0: i32) -> (i32, i32) {
    %c0_i32 = arith.constant 0 : i32
    %c0_i32_0 = arith.constant 0 : i32
    return %c0_i32, %arg0 : i32, i32
  }
  func.func @transform_2(%arg0: i32) -> (i32, i32) {
    %c0_i32 = arith.constant 0 : i32
    %c0_i32_0 = arith.constant 0 : i32
    return %c0_i32, %arg0 : i32, i32
  }
  func.func @transform_3(%arg0: i32) -> (i32, i32) {
    %c0_i32 = arith.constant 0 : i32
    %c0_i32_0 = arith.constant 0 : i32
    return %c0_i32, %arg0 : i32, i32
  }
}

</mosaic_0001>

<llo_original>
// kernel: tpu_custom_call.1
$region0: #{tpu_custom_call.1}
  #allocation0 [shape = 'u32[]', space=smem, size = 0x4, offset = 0x4, fixed_abs, tag = 'smem constant byte address 0x4 - core index']
  #allocation1 [shape = 'u32[72,128]{1,0:T(1,128)}', space=vmem, size = 0x9000, scoped, tag = 'internal scratch']
  %s0 = inlined_call_operand.hbm [shape: f32[16,32], index: 0, kind: input, shape index: {}]
  %s1 = inlined_call_operand.hbm [shape: f32[1,32], index: 1, kind: input, shape index: {}]
  %s2 = inlined_call_operand.vmem [shape: f32[1,32], index: 2, kind: input, shape index: {}]
  %s3 = inlined_call_operand.hbm [shape: f32[16,32], index: 3, kind: output, shape index: {}]
  %s4 = sld [smem:[#allocation0]]
  $region30: #{tpu_custom_call.1} parent=0
    _
  %s6 = ssub.s32 1, %s4
  %s7 = scalar_select 0, %s6, %s4
  $region1: #{tpu_custom_call.1} parent=0
    #allocation2 [shape = 'u8[8192]{0}', space=vmem, size = 0x2000, scoped, tag = 'input window, operand 0, single buffered']
    #allocation3 [shape = 's32[1]{0}', space=sflag, size = 0x4, scoped, tag = 'scoped memory for tpu_custom_call.1']
    #allocation4 [shape = 's32[1]{0}', space=sflag, size = 0x4, scoped, tag = 'scoped memory for tpu_custom_call.1']
    #allocation5 [shape = 'u8[512]{0}', space=vmem, size = 0x400, scoped, tag = 'input window, operand 1, single buffered']
    #allocation6 [shape = 's32[1]{0}', space=sflag, size = 0x4, scoped, tag = 'scoped memory for tpu_custom_call.1']
    #allocation7 [shape = 'u8[8192]{0}', space=vmem, size = 0x2000, scoped, tag = 'output window, operand 0, single buffered']
    %8 = vsyncpa [#allocation3], 0
    %9 = vsyncpa [#allocation6], 0
    %10 = vsyncpa [#allocation4], 0
    // Predicated region
    $region2: #{tpu_custom_call.1} parent=1 // pred_check
      _
    $region3: #{tpu_custom_call.1} parent=1 // pred_check_branch
      %12 = sbr.rel (0) target = $region5
    $region4: #{tpu_custom_call.1} parent=1 // pred_region
      %14 = vsyncadd [#allocation3], 0
      %s15 = sshll.u32 %s0, 4
      %s16 = int_to_ptr.hbm [resolvable:$true] %s15
      %s17 = sshll.u32 [#allocation2], 4
      %s18 = int_to_ptr.vmem [resolvable:$true] %s17
      %23 = dma.hbm_to_vmem [thread:$0]  %s16, 256, %s18, [#allocation3], 128, 128, 8
    $region5: #{tpu_custom_call.1} parent=1 // pred_fallthru
      _
    // Predicated region
    $region6: #{tpu_custom_call.1} parent=1 // pred_check
      _
    $region7: #{tpu_custom_call.1} parent=1 // pred_check_branch
      %25 = sbr.rel (0) target = $region9
    $region8: #{tpu_custom_call.1} parent=1 // pred_region
      %27 = vsyncadd [#allocation6], 0
      %s29 = sshll.u32 %s1, 4
      %s30 = int_to_ptr.hbm [resolvable:$true] %s29
      %s31 = sshll.u32 [#allocation5], 4
      %s32 = int_to_ptr.vmem [resolvable:$true] %s31
      %34 = dma.hbm_to_vmem [thread:$0]  %s30, 16, %s32, [#allocation6]
    $region9: #{tpu_custom_call.1} parent=1 // pred_fallthru
      _
    // Predicated region
    $region10: #{tpu_custom_call.1} parent=1 // pred_check
      _
    $region11: #{tpu_custom_call.1} parent=1 // pred_check_branch
      %36 = sbr.rel (0) target = $region13
    $region12: #{tpu_custom_call.1} parent=1 // pred_region
      _
    $region13: #{tpu_custom_call.1} parent=1 // pred_fallthru
      _
    // Predicated region
    $region14: #{tpu_custom_call.1} parent=1 // pred_check
      _
    $region15: #{tpu_custom_call.1} parent=1 // pred_check_branch
      %38 = sbr.rel (0) target = $region17
    $region16: #{tpu_custom_call.1} parent=1 // pred_region
      %40 = dma.done [#allocation3], 256
    $region17: #{tpu_custom_call.1} parent=1 // pred_fallthru
      _
    // Predicated region
    $region18: #{tpu_custom_call.1} parent=1 // pred_check
      _
    $region19: #{tpu_custom_call.1} parent=1 // pred_check_branch
      %42 = sbr.rel (0) target = $region21
    $region20: #{tpu_custom_call.1} parent=1 // pred_region
      %44 = dma.done [#allocation6], 16
    $region21: #{tpu_custom_call.1} parent=1 // pred_fallthru
      _
    %v45 = vld [vmem:[#allocation2] sm:$0xff]
    %v46 = vld [vmem:[#allocation2 + $0x8] sm:$0xff]
    %vm47 = vcmask 261120
    %v48 = vsel %vm47, %v45, 0.0
    %v49 = vsel %vm47, %v46, 0.0
    %v50 = vadd.f32 %v48, %v49
    %v51 = vrot.slane %v50, 4
    %v52 = vadd.f32 %v50, %v51
    %v53 = vrot.slane %v52, 2
    %v54 = vadd.f32 %v52, %v53
    %v55 = vrot.slane %v54, 1
    %v56 = vadd.f32 %v54, %v55
    %v57 = vmul.f32 %v45, %v45
    %v58 = vmul.f32 %v46, %v46
    %v59 = vsel %vm47, %v57, 0.0
    %v60 = vsel %vm47, %v58, 0.0
    %v61 = vadd.f32 %v59, %v60
    %v62 = vrot.slane %v61, 4
    %v63 = vadd.f32 %v61, %v62
    %v64 = vrot.slane %v63, 2
    %v65 = vadd.f32 %v63, %v64
    %v66 = vrot.slane %v65, 1
    %v67 = vadd.f32 %v65, %v66
    %v68 = vmul.f32 %v56, 0.0625
    %v69 = vmul.f32 %v67, 0.0625
    %v70 = vmul.f32 %v68, %v68
    %v71 = vsub.f32 %v69, %v70
    %v72 = vmax.f32 %v71, 0.0
    %v73 = vadd.f32 %v72, 1e-06
    %v74 = vrsqrt.pop %v73
    %v75 = vmul.f32 %v74, %v73
    %v76 = vmul.f32 %v75, %v74
    %v77 = vmul.f32 0.5, %v76
    %v78 = vsub.f32 1.5, %v77
    %v79 = vmul.f32 %v74, %v78
    %vm80 = vweird.f32 %v73
    %vm81 = vweird.f32 %v74
    %vm82 = vmor %vm80, %vm81
    %v83 = vsel %vm82, %v74, %v79
    %v84 = vld [vmem:[#allocation5] sm:$0x1]
    %v85 = vmul.f32 %v84, %v83
    %v86 = vld [vmem:[%s2] sm:$0x1]
    %v87 = vmul.f32 %v68, %v85
    %v88 = vsub.f32 %v86, %v87
    %v90 = vperm.slane %v85, 0
    %v92 = vmul.f32 %v45, %v90
    %v93 = vmul.f32 %v46, %v90
    %v95 = vperm.slane %v88, 0
    %v97 = vadd.f32 %v92, %v95
    %v98 = vadd.f32 %v93, %v95
    %99 = vst.msk [vmem:[#allocation7] sm:$0xff] %vm47, %v97
    %100 = vst.msk [vmem:[#allocation7 + $0x8] sm:$0xff] %vm47, %v98
    // Predicated region
    $region22: #{tpu_custom_call.1} parent=1 // pred_check
      _
    $region23: #{tpu_custom_call.1} parent=1 // pred_check_branch
      %102 = sbr.rel (0) target = $region25
    $region24: #{tpu_custom_call.1} parent=1 // pred_region
      %104 = vsyncadd [#allocation4], 0
      %s105 = sshll.u32 [#allocation7], 4
      %s106 = int_to_ptr.vmem [resolvable:$true] %s105
      %s107 = sshll.u32 %s3, 4
      %s108 = int_to_ptr.hbm [resolvable:$true] %s107
      %113 = dma.vmem_to_hbm [thread:$0]  %s106, 256, %s108, [#allocation4], 128, 128, 8
    $region25: #{tpu_custom_call.1} parent=1 // pred_fallthru
      _
    // Predicated region
    $region26: #{tpu_custom_call.1} parent=1 // pred_check
      _
    $region27: #{tpu_custom_call.1} parent=1 // pred_check_branch
      %115 = sbr.rel (0) target = $region29
    $region28: #{tpu_custom_call.1} parent=1 // pred_region
      %117 = dma.done [#allocation4], 256
    $region29: #{tpu_custom_call.1} parent=1 // pred_fallthru
      _
    %118 = vsyncpa [#allocation3], 1
    %119 = vsyncpa [#allocation6], 1
    %120 = vsyncpa [#allocation4], 1

</llo_original>
